<compile_context>
chip_gen: v7x
topology: tpu7x:2x2x1
jax: 0.10.0
libtpu: 0.0.40
codegen_flags: <defaults>
</compile_context>

<pallas_src>
import jax
import jax.numpy as jnp
import jax.scipy as jsp
from jax import random
from jax.experimental import pallas as pl
from jax.experimental.pallas import tpu as pltpu

JITTER = 1e-5


def _round_up(a, b):
    return ((a + b - 1) // b) * b


def _pad_cols(a, target):
    pad = target - a.shape[-1]
    if pad:
        a = jnp.pad(a, [(0, 0)] * (a.ndim - 1) + [(0, pad)])
    return a


def _pad_rows(a, target):
    pad = target - a.shape[0]
    if pad:
        a = jnp.pad(a, [(0, pad)] + [(0, 0)] * (a.ndim - 1))
    return a


# ----------------------------------------------------------------------------
# Kernel: one grid step = one tile of N rows, all output dims at once.
#   f_prior[n,d]  = sum_s cos(x@omega[:,s,d] + phase[s,d]) * w[s,d]*sqrt(var_d/S)
#   f_update[n,d] = sum_m var_d * exp(-0.5*||(x_n - z_m)/ls_d||^2) * nu[d,m]
# Column layouts: prior cols = d*S+s (padded to Cs_p), update cols = d*M+m
# (padded to Cm_p); w_bd / nu_bd are block-diagonal reductions back to D_out.
# ----------------------------------------------------------------------------
def _dsvgp_kernel(x_ref, om_ref, ph_ref, wbd_ref, zsc_ref, qrep_ref, z2c_ref,
                  nubd_ref, o_ref):
    x = x_ref[...]                                   # (nt, D_in) f32
    x_bf = x.astype(jnp.bfloat16)

    # ---- RFF prior sample (bf16 MXU inputs, f32 accumulation) ----
    xo = jnp.dot(x_bf, om_ref[...],
                 preferred_element_type=jnp.float32)               # (nt, Cs_p) f32
    phi = jnp.cos(xo + ph_ref[...])                                # f32 elementwise
    f_prior = jnp.dot(phi.astype(jnp.bfloat16), wbd_ref[...],
                      preferred_element_type=jnp.float32)          # (nt, D_out)

    # ---- pathwise update: full RBF exponent (<= 0) assembled before exp ----
    # exponent = x.(z/ls^2) - 0.5*x^2.(1/ls^2) - 0.5*||z/ls||^2
    # kept in f32: K = D_in is tiny and exp() is sensitive to exponent error.
    expo = (jnp.dot(x, zsc_ref[...], preferred_element_type=jnp.float32)
            + jnp.dot(x * x, qrep_ref[...], preferred_element_type=jnp.float32)
            + z2c_ref[...])                                        # (nt, Cm_p) f32
    f_update = jnp.dot(jnp.exp(expo).astype(jnp.bfloat16), nubd_ref[...],
                       preferred_element_type=jnp.float32)         # (nt, D_out)

    o_ref[...] = f_prior + f_update


def dsvgp_forward_pallas(x, Z, omega, phase, weights, variance, lengthscales,
                         nu, *, n_tile=None, vmem_budget_bytes=40 << 20):
    """x:(N,D_in)  Z:(M,D_in)  omega:(D_in,S,D_out)  phase:(1,S,D_out)
       weights:(S,D_out)  variance:(D_out,)  lengthscales:(D_out,D_in)
       nu:(D_out,M)   ->  (N, D_out) float32"""
    N, D_in = x.shape
    M = Z.shape[0]
    S, D_out = weights.shape
    f32, bf16 = jnp.float32, jnp.bfloat16

    Cs, Cm = D_out * S, D_out * M
    Cs_p, Cm_p = _round_up(Cs, 128), _round_up(Cm, 128)   # lane-dense operand widths

    inv_ls2 = (1.0 / lengthscales.astype(f32)) ** 2                    # (D_out, D_in)
    eye_d = jnp.eye(D_out, dtype=f32)

    # ---- RFF prior operands (column index = d*S + s) ----
    omega_flat = jnp.transpose(omega.astype(f32), (0, 2, 1)).reshape(D_in, Cs)
    omega_flat = _pad_cols(omega_flat, Cs_p).astype(bf16)              # (D_in, Cs_p) bf16
    phase_flat = _pad_cols(
        jnp.transpose(phase.astype(f32), (0, 2, 1)).reshape(1, Cs), Cs_p)   # (1, Cs_p) f32
    w_scaled = weights.astype(f32) * jnp.sqrt(variance.astype(f32) / S)[None, :]
    w_bd = (jnp.transpose(w_scaled)[:, :, None] * eye_d[:, None, :]).reshape(Cs, D_out)
    w_bd = _pad_rows(w_bd, Cs_p).astype(bf16)                          # (Cs_p, D_out) bf16

    # ---- pathwise-update operands (column index = d*M + m) ----
    zsc = Z.astype(f32)[None, :, :] * inv_ls2[:, None, :]              # (D_out, M, D_in)
    zsc_flat = _pad_cols(jnp.transpose(zsc, (2, 0, 1)).reshape(D_in, Cm), Cm_p)    # f32
    qrep = jnp.broadcast_to((-0.5 * inv_ls2)[:, None, :], (D_out, M, D_in))
    qrep = _pad_cols(jnp.transpose(qrep, (2, 0, 1)).reshape(D_in, Cm), Cm_p)       # f32
    z2 = jnp.einsum('mk,dk->dm', Z.astype(f32) ** 2, inv_ls2)          # (D_out, M)
    z2c = _pad_cols((-0.5 * z2).reshape(1, Cm), Cm_p)                  # (1, Cm_p) f32
    nu_bd = ((variance.astype(f32)[:, None] * nu.astype(f32))[:, :, None]
             * eye_d[:, None, :]).reshape(Cm, D_out)
    nu_bd = _pad_rows(nu_bd, Cm_p).astype(bf16)                        # (Cm_p, D_out) bf16

    # ---- VMEM-budgeted N tile, explicit vmem limit, >=2 steps when N allows ----
    weight_bytes = (D_in * Cs_p * 2 + Cs_p * 4 + Cs_p * D_out * 2      # omega, phase, w_bd
                    + 2 * D_in * Cm_p * 4 + Cm_p * 4 + Cm_p * D_out * 2)  # zsc+qrep, z2c, nu_bd
    per_row_bytes = 2 * (D_in + D_out) * 4 + 2 * (Cs_p + Cm_p) * 4     # x/out dbuf + live f32 tiles
    if n_tile is None:
        nt = (vmem_budget_bytes - weight_bytes) // max(per_row_bytes, 1)
        nt = int(max(8, min(1024, (nt // 8) * 8)))
    else:
        nt = int(max(8, (n_tile // 8) * 8))
    if N >= 16:  # let the "parallel" N axis split across v7x's two TensorCores
        nt = min(nt, max(8, _round_up(pl.cdiv(N, 2), 8)))
    nt = min(nt, _round_up(N, 8))
    vmem_limit = int(min(max(weight_bytes + nt * per_row_bytes + (4 << 20), 32 << 20),
                         48 << 20))

    # Grid-invariant operands: whole-array VMEM residence (single copy, no
    # per-step double buffering).
    vmem_res = pl.BlockSpec(memory_space=pltpu.MemorySpace.VMEM)

    out = pl.pallas_call(
        _dsvgp_kernel,
        out_shape=jax.ShapeDtypeStruct((N, D_out), f32),
        grid_spec=pltpu.PrefetchScalarGridSpec(
            num_scalar_prefetch=0,
            grid=(pl.cdiv(N, nt),),
            in_specs=[
                pl.BlockSpec((nt, D_in), lambda i: (i, 0)),   # x (pipelined over N)
                vmem_res,   # omega_flat
                vmem_res,   # phase_flat
                vmem_res,   # w_bd
                vmem_res,   # zsc_flat
                vmem_res,   # qrep
                vmem_res,   # z2c
                vmem_res,   # nu_bd
            ],
            out_specs=pl.BlockSpec((nt, D_out), lambda i: (i, 0)),
        ),
        compiler_params=pltpu.CompilerParams(
            dimension_semantics=("parallel",),
            vmem_limit_bytes=vmem_limit),
    )(x.astype(f32), omega_flat, phase_flat, w_bd, zsc_flat, qrep, z2c, nu_bd)

    return out


# ----------------------------------------------------------------------------
# Plain-JAX reference (mirrors the PyTorch forward) and build_cache glue.
# ----------------------------------------------------------------------------
def rbf_K_dimwise(X1, X2, lengthscales, variance):
    Xs1 = X1[None, :, :] / lengthscales[:, None, :]          # (D_out, A, D_in)
    Xs2 = X2[None, :, :] / lengthscales[:, None, :]          # (D_out, B, D_in)
    s1 = jnp.sum(Xs1 ** 2, axis=-1)
    s2 = jnp.sum(Xs2 ** 2, axis=-1)
    cross = jnp.einsum('dak,dbk->dab', Xs1, Xs2)
    sq = s1[:, :, None] + s2[:, None, :] - 2.0 * cross
    return variance[:, None, None] * jnp.exp(-0.5 * sq)      # (D_out, A, B)


def rff_forward_ref(x, omega, phase, weights, variance):
    S = weights.shape[0]
    xo = jnp.einsum('nd,dfk->nfk', x, omega)
    phi = jnp.cos(xo + phase) * jnp.sqrt(variance / S)
    return jnp.einsum('nfk,fk->nk', phi, weights)            # (N, D_out)


def dsvgp_forward_ref(x, Z, omega, phase, weights, variance, lengthscales, nu):
    f_prior = rff_forward_ref(x, omega, phase, weights, variance)
    Kuf = rbf_K_dimwise(Z, x, lengthscales, variance)        # (D_out, M, N)
    f_update = jnp.einsum('dm,dmn->nd', nu, Kuf)
    return f_prior + f_update


if __name__ == "__main__":
    # Small shapes consistent with the module: x is (N, D_in).
    D_in, D_out, M, S, N = 4, 4, 16, 32, 8

    key = random.PRNGKey(0)
    k_z, k_w, k_om, k_ph, k_x, k_eps = random.split(key, 6)

    # Deterministic RBF hyperparameters (dimwise): positive lengthscales / variances.
    lengthscales = 1.0 + 0.1 * (jnp.arange(D_out, dtype=jnp.float32)[:, None]
                                + jnp.arange(D_in, dtype=jnp.float32)[None, :])   # (D_out, D_in)
    variance = 1.0 + 0.1 * jnp.arange(D_out, dtype=jnp.float32)                   # (D_out,)

    # Module parameters from __init__.
    inducing_loc = random.normal(k_z, (M, D_in), dtype=jnp.float32)               # (M, D_in)
    Um = jnp.zeros((M, D_out), dtype=jnp.float32)
    Us_sqrt = jnp.stack([jnp.eye(M, dtype=jnp.float32)] * D_out) * 0.1            # (D_out, M, M)

    # build_cache (setup glue in plain JAX: sampling, Cholesky, triangular solves).
    # TODO(synk): Cholesky / triangular solves have no clean Pallas equivalent; kept in JAX glue.
    rff_weights = random.normal(k_w, (S, D_out), dtype=jnp.float32)
    omega_raw = random.normal(k_om, (D_in, S, D_out), dtype=jnp.float32)
    rff_omega = omega_raw / jnp.transpose(lengthscales)[:, None, :]               # (D_in, S, D_out)
    rff_phase = random.uniform(k_ph, (1, S, D_out), dtype=jnp.float32) * 2.0 * jnp.pi

    epsilon = random.normal(k_eps, (M, D_out), dtype=jnp.float32)
    ZS = jnp.einsum('dnm,md->nd', Us_sqrt, epsilon)
    u_sample = ZS + Um                                                            # (M, D_out)

    Ku = rbf_K_dimwise(inducing_loc, inducing_loc, lengthscales, variance)        # (D_out, M, M)
    Lu = jnp.linalg.cholesky(Ku + jnp.eye(M, dtype=jnp.float32) * JITTER)
    u_prior = rff_forward_ref(inducing_loc, rff_omega, rff_phase, rff_weights,
                              variance)                                           # (M, D_out)
    nu = jsp.linalg.solve_triangular(Lu, jnp.transpose(u_prior)[:, :, None],
                                     lower=True)
    nu = jsp.linalg.solve_triangular(jnp.transpose(Lu, (0, 2, 1)),
                                     jnp.transpose(u_sample)[:, :, None] - nu,
                                     lower=False)
    nu = nu[:, :, 0]                                                              # (D_out, M)

    # Forward input.
    x = random.normal(k_x, (N, D_in), dtype=jnp.float32)

    out = dsvgp_forward_pallas(x, inducing_loc, rff_omega, rff_phase, rff_weights,
                               variance, lengthscales, nu)
    out = jax.block_until_ready(out)

    ref = dsvgp_forward_ref(x, inducing_loc, rff_omega, rff_phase, rff_weights,
                            variance, lengthscales, nu)

    assert out.shape == (N, D_out)
    assert bool(jnp.all(jnp.isfinite(out)))
    # bf16 MXU inputs with f32 accumulation: tolerance scaled by the magnitude
    # of values flowing through the reductions (handles cancellation fairly).
    max_err = float(jnp.max(jnp.abs(out - ref)))
    tol = 2e-2 * (1.0 + float(jnp.max(jnp.abs(ref))))
    assert max_err <= tol, (max_err, tol)
    print("KERNEL_OK")
</pallas_src>

<mosaic_0001>
module attributes {stable_mosaic.version = 11 : i64} {
  func.func @_dsvgp_kernel(%arg0: i32, %arg1: memref<8x4xf32, #tpu.memory_space<vmem>>, %arg2: memref<4x128xbf16, #tpu.memory_space<vmem>>, %arg3: memref<1x128xf32, #tpu.memory_space<vmem>>, %arg4: memref<128x4xbf16, #tpu.memory_space<vmem>>, %arg5: memref<4x128xf32, #tpu.memory_space<vmem>>, %arg6: memref<4x128xf32, #tpu.memory_space<vmem>>, %arg7: memref<1x128xf32, #tpu.memory_space<vmem>>, %arg8: memref<128x4xbf16, #tpu.memory_space<vmem>>, %arg9: memref<8x4xf32, #tpu.memory_space<vmem>>) attributes {dimension_semantics = [#tpu.dimension_semantics<parallel>], iteration_bounds = array<i64: 1>, scalar_prefetch = 0 : i64, scratch_operands = 0 : i64, tpu.core_type = #tpu.core_type<tc>, window_params = [{transform_indices = @transform_0, window_bounds = array<i64: 8, 4>}, {pipeline_mode = #tpu.pipeline_mode<synchronous>, transform_indices = @transform_1, window_bounds = array<i64: 4, 128>}, {pipeline_mode = #tpu.pipeline_mode<synchronous>, transform_indices = @transform_2, window_bounds = array<i64: 1, 128>}, {pipeline_mode = #tpu.pipeline_mode<synchronous>, transform_indices = @transform_3, window_bounds = array<i64: 128, 4>}, {pipeline_mode = #tpu.pipeline_mode<synchronous>, transform_indices = @transform_4, window_bounds = array<i64: 4, 128>}, {pipeline_mode = #tpu.pipeline_mode<synchronous>, transform_indices = @transform_5, window_bounds = array<i64: 4, 128>}, {pipeline_mode = #tpu.pipeline_mode<synchronous>, transform_indices = @transform_6, window_bounds = array<i64: 1, 128>}, {pipeline_mode = #tpu.pipeline_mode<synchronous>, transform_indices = @transform_7, window_bounds = array<i64: 128, 4>}, {transform_indices = @transform_8, window_bounds = array<i64: 8, 4>}]} {
    %c0 = arith.constant 0 : index
    %c0_0 = arith.constant 0 : index
    %0 = vector.load %arg1[%c0, %c0_0] : memref<8x4xf32, #tpu.memory_space<vmem>>, vector<8x4xf32>
    %1 = arith.truncf %0 : vector<8x4xf32> to vector<8x4xbf16>
    %c0_1 = arith.constant 0 : index
    %c0_2 = arith.constant 0 : index
    %2 = vector.load %arg2[%c0_1, %c0_2] : memref<4x128xbf16, #tpu.memory_space<vmem>>, vector<4x128xbf16>
    %cst = arith.constant dense<0.000000e+00> : vector<8x128xf32>
    %3 = tpu.matmul %1, %2, %cst {dimension_numbers = #tpu.dot_dimension_numbers<[1], [0], [0], [1], [0, 0, 1, 1], [], []>} : vector<8x4xbf16>, vector<4x128xbf16>, vector<8x128xf32> -> vector<8x128xf32>
    %c0_3 = arith.constant 0 : index
    %c0_4 = arith.constant 0 : index
    %4 = vector.load %arg3[%c0_3, %c0_4] : memref<1x128xf32, #tpu.memory_space<vmem>>, vector<1x128xf32>
    %5 = vector.broadcast %4 : vector<1x128xf32> to vector<8x128xf32>
    %6 = arith.addf %3, %5 : vector<8x128xf32>
    %7 = math.cos %6 : vector<8x128xf32>
    %8 = arith.truncf %7 : vector<8x128xf32> to vector<8x128xbf16>
    %c0_5 = arith.constant 0 : index
    %c0_6 = arith.constant 0 : index
    %9 = vector.load %arg4[%c0_5, %c0_6] : memref<128x4xbf16, #tpu.memory_space<vmem>>, vector<128x4xbf16>
    %cst_7 = arith.constant dense<0.000000e+00> : vector<8x4xf32>
    %10 = tpu.matmul %8, %9, %cst_7 {dimension_numbers = #tpu.dot_dimension_numbers<[1], [0], [0], [1], [0, 0, 1, 1], [], []>} : vector<8x128xbf16>, vector<128x4xbf16>, vector<8x4xf32> -> vector<8x4xf32>
    %c0_8 = arith.constant 0 : index
    %c0_9 = arith.constant 0 : index
    %11 = vector.load %arg5[%c0_8, %c0_9] : memref<4x128xf32, #tpu.memory_space<vmem>>, vector<4x128xf32>
    %cst_10 = arith.constant dense<0.000000e+00> : vector<8x128xf32>
    %12 = tpu.matmul %0, %11, %cst_10 {dimension_numbers = #tpu.dot_dimension_numbers<[1], [0], [0], [1], [0, 0, 1, 1], [], []>} : vector<8x4xf32>, vector<4x128xf32>, vector<8x128xf32> -> vector<8x128xf32>
    %13 = arith.mulf %0, %0 : vector<8x4xf32>
    %c0_11 = arith.constant 0 : index
    %c0_12 = arith.constant 0 : index
    %14 = vector.load %arg6[%c0_11, %c0_12] : memref<4x128xf32, #tpu.memory_space<vmem>>, vector<4x128xf32>
    %cst_13 = arith.constant dense<0.000000e+00> : vector<8x128xf32>
    %15 = tpu.matmul %13, %14, %cst_13 {dimension_numbers = #tpu.dot_dimension_numbers<[1], [0], [0], [1], [0, 0, 1, 1], [], []>} : vector<8x4xf32>, vector<4x128xf32>, vector<8x128xf32> -> vector<8x128xf32>
    %16 = arith.addf %12, %15 : vector<8x128xf32>
    %c0_14 = arith.constant 0 : index
    %c0_15 = arith.constant 0 : index
    %17 = vector.load %arg7[%c0_14, %c0_15] : memref<1x128xf32, #tpu.memory_space<vmem>>, vector<1x128xf32>
    %18 = vector.broadcast %17 : vector<1x128xf32> to vector<8x128xf32>
    %19 = arith.addf %16, %18 : vector<8x128xf32>
    %20 = math.exp %19 : vector<8x128xf32>
    %21 = arith.truncf %20 : vector<8x128xf32> to vector<8x128xbf16>
    %c0_16 = arith.constant 0 : index
    %c0_17 = arith.constant 0 : index
    %22 = vector.load %arg8[%c0_16, %c0_17] : memref<128x4xbf16, #tpu.memory_space<vmem>>, vector<128x4xbf16>
    %cst_18 = arith.constant dense<0.000000e+00> : vector<8x4xf32>
    %23 = tpu.matmul %21, %22, %cst_18 {dimension_numbers = #tpu.dot_dimension_numbers<[1], [0], [0], [1], [0, 0, 1, 1], [], []>} : vector<8x128xbf16>, vector<128x4xbf16>, vector<8x4xf32> -> vector<8x4xf32>
    %24 = arith.addf %10, %23 : vector<8x4xf32>
    %c0_19 = arith.constant 0 : index
    %c0_20 = arith.constant 0 : index
    %25 = vector.load %arg9[%c0_19, %c0_20] : memref<8x4xf32, #tpu.memory_space<vmem>>, vector<8x4xf32>
    tpu.vector_store %arg9[%c0_19, %c0_20], %24 {strides = array<i32>} : memref<8x4xf32, #tpu.memory_space<vmem>>, vector<8x4xf32>,
    return
  }
  func.func @transform_0(%arg0: i32) -> (i32, i32) {
    %c0_i32 = arith.constant 0 : i32
    %c0_i32_0 = arith.constant 0 : i32
    return %arg0, %c0_i32 : i32, i32
  }
  func.func @transform_1(%arg0: i32) -> (i32, i32) {
    %c0_i32 = arith.constant 0 : i32
    %c0_i32_0 = arith.constant 0 : i32
    %c0_i32_1 = arith.constant 0 : i32
    return %c0_i32, %c0_i32_0 : i32, i32
  }
  func.func @transform_2(%arg0: i32) -> (i32, i32) {
    %c0_i32 = arith.constant 0 : i32
    %c0_i32_0 = arith.constant 0 : i32
    %c0_i32_1 = arith.constant 0 : i32
    return %c0_i32, %c0_i32_0 : i32, i32
  }
  func.func @transform_3(%arg0: i32) -> (i32, i32) {
    %c0_i32 = arith.constant 0 : i32
    %c0_i32_0 = arith.constant 0 : i32
    %c0_i32_1 = arith.constant 0 : i32
    return %c0_i32, %c0_i32_0 : i32, i32
  }
  func.func @transform_4(%arg0: i32) -> (i32, i32) {
    %c0_i32 = arith.constant 0 : i32
    %c0_i32_0 = arith.constant 0 : i32
    %c0_i32_1 = arith.constant 0 : i32
    return %c0_i32, %c0_i32_0 : i32, i32
  }
  func.func @transform_5(%arg0: i32) -> (i32, i32) {
    %c0_i32 = arith.constant 0 : i32
    %c0_i32_0 = arith.constant 0 : i32
    %c0_i32_1 = arith.constant 0 : i32
    return %c0_i32, %c0_i32_0 : i32, i32
  }
  func.func @transform_6(%arg0: i32) -> (i32, i32) {
    %c0_i32 = arith.constant 0 : i32
    %c0_i32_0 = arith.constant 0 : i32
    %c0_i32_1 = arith.constant 0 : i32
    return %c0_i32, %c0_i32_0 : i32, i32
  }
  func.func @transform_7(%arg0: i32) -> (i32, i32) {
    %c0_i32 = arith.constant 0 : i32
    %c0_i32_0 = arith.constant 0 : i32
    %c0_i32_1 = arith.constant 0 : i32
    return %c0_i32, %c0_i32_0 : i32, i32
  }
  func.func @transform_8(%arg0: i32) -> (i32, i32) {
    %c0_i32 = arith.constant 0 : i32
    %c0_i32_0 = arith.constant 0 : i32
    return %arg0, %c0_i32 : i32, i32
  }
}

</mosaic_0001>

<llo_original>
// kernel: tpu_custom_call.1
$region0: #{tpu_custom_call.1}
  #allocation0 [shape = 'u32[]', space=smem, size = 0x4, offset = 0x4, fixed_abs, tag = 'smem constant byte address 0x4 - core index']
  #allocation1 [shape = 'u32[144,128]{1,0:T(1,128)}', space=vmem, size = 0x12000, scoped, tag = 'internal scratch']
  %s0 = inlined_call_operand.vmem [shape: f32[8,4], index: 0, kind: input, shape index: {}]
  %s1 = inlined_call_operand.vmem [shape: bf16[4,128], index: 1, kind: input, shape index: {}]
  %s2 = inlined_call_operand.vmem [shape: f32[1,128], index: 2, kind: input, shape index: {}]
  %s3 = inlined_call_operand.vmem [shape: bf16[128,4], index: 3, kind: input, shape index: {}]
  %s4 = inlined_call_operand.vmem [shape: f32[4,128], index: 4, kind: input, shape index: {}]
  %s5 = inlined_call_operand.vmem [shape: f32[4,128], index: 5, kind: input, shape index: {}]
  %s6 = inlined_call_operand.vmem [shape: f32[1,128], index: 6, kind: input, shape index: {}]
  %s7 = inlined_call_operand.vmem [shape: bf16[128,4], index: 7, kind: input, shape index: {}]
  %s8 = inlined_call_operand.vmem [shape: f32[8,4], index: 8, kind: output, shape index: {}]
  %s9 = sld [smem:[#allocation0]]
  $region42: #{tpu_custom_call.1} parent=0
    _
  %s11 = ssub.s32 1, %s9
  %s12 = scalar_select 0, %s11, %s9
  // Predicated region
  $region2: #{tpu_custom_call.1} parent=0 // pred_check
    _
  $region3: #{tpu_custom_call.1} parent=0 // pred_check_branch
    %14 = sbr.rel (0) target = $region5
  $region4: #{tpu_custom_call.1} parent=0 // pred_region
    _
  $region5: #{tpu_custom_call.1} parent=0 // pred_fallthru
    _
  // Predicated region
  $region6: #{tpu_custom_call.1} parent=0 // pred_check
    _
  $region7: #{tpu_custom_call.1} parent=0 // pred_check_branch
    %16 = sbr.rel (0) target = $region9
  $region8: #{tpu_custom_call.1} parent=0 // pred_region
    _
  $region9: #{tpu_custom_call.1} parent=0 // pred_fallthru
    _
  // Predicated region
  $region10: #{tpu_custom_call.1} parent=0 // pred_check
    _
  $region11: #{tpu_custom_call.1} parent=0 // pred_check_branch
    %18 = sbr.rel (0) target = $region13
  $region12: #{tpu_custom_call.1} parent=0 // pred_region
    _
  $region13: #{tpu_custom_call.1} parent=0 // pred_fallthru
    _
  // Predicated region
  $region14: #{tpu_custom_call.1} parent=0 // pred_check
    _
  $region15: #{tpu_custom_call.1} parent=0 // pred_check_branch
    %20 = sbr.rel (0) target = $region17
  $region16: #{tpu_custom_call.1} parent=0 // pred_region
    _
  $region17: #{tpu_custom_call.1} parent=0 // pred_fallthru
    _
  // Predicated region
  $region18: #{tpu_custom_call.1} parent=0 // pred_check
    _
  $region19: #{tpu_custom_call.1} parent=0 // pred_check_branch
    %22 = sbr.rel (0) target = $region21
  $region20: #{tpu_custom_call.1} parent=0 // pred_region
    _
  $region21: #{tpu_custom_call.1} parent=0 // pred_fallthru
    _
  // Predicated region
  $region22: #{tpu_custom_call.1} parent=0 // pred_check
    _
  $region23: #{tpu_custom_call.1} parent=0 // pred_check_branch
    %24 = sbr.rel (0) target = $region25
  $region24: #{tpu_custom_call.1} parent=0 // pred_region
    _
  $region25: #{tpu_custom_call.1} parent=0 // pred_fallthru
    _
  // Predicated region
  $region26: #{tpu_custom_call.1} parent=0 // pred_check
    _
  $region27: #{tpu_custom_call.1} parent=0 // pred_check_branch
    %26 = sbr.rel (0) target = $region29
  $region28: #{tpu_custom_call.1} parent=0 // pred_region
    _
  $region29: #{tpu_custom_call.1} parent=0 // pred_fallthru
    _
  // Predicated region
  $region30: #{tpu_custom_call.1} parent=0 // pred_check
    _
  $region31: #{tpu_custom_call.1} parent=0 // pred_check_branch
    %28 = sbr.rel (0) target = $region33
  $region32: #{tpu_custom_call.1} parent=0 // pred_region
    _
  $region33: #{tpu_custom_call.1} parent=0 // pred_fallthru
    _
  %v30 = vld [vmem:[%s0] sm:$0xff]
  %v31 = vpack.c.bf16 %v30, %v30
  %v32 = vld [vmem:[%s1] sm:$0x3]
  %v33 = vld [vmem:[%s2] sm:$0x1]
  %v35 = vlaneseq
  %v36 = vshrl.u32 %v35, 7
  %v37 = vsub.s32 0, %v36
  %v38 = vrot.slane %v33, %v37
  %vm40 = vcmask 31744
  %v42 = vsel %vm40, %v31, 0
  %vm44 = vcmask 1041408
  %v46 = vsel %vm44, %v32, 0
  %48 = vmatprep.subr.bf16.mxu0 0
  %49 = vmatpush1.bf16.msra.mxu0 %v46
  %50 = vmatprep.subr.bf16.mxu0 0
  %51 = vmatpush1.bf16.msra.mxu0 0
  %52 = vmatprep.subr.bf16.mxu0 0
  %53 = vmatpush1.bf16.msra.mxu0 0
  %54 = vmatprep.subr.bf16.mxu0 0
  %55 = vmatpush1.bf16.msra.mxu0 0
  %56 = vmatprep.subr.bf16.mxu0 0
  %57 = vmatpush1.bf16.msra.mxu0 0
  %58 = vmatprep.subr.bf16.mxu0 0
  %59 = vmatpush1.bf16.msra.mxu0 0
  %60 = vmatprep.subr.bf16.mxu0 0
  %61 = vmatpush1.bf16.msra.mxu0 0
  %62 = vmatprep.subr.bf16.mxu0 0
  %63 = vmatpush1.bf16.msra.mxu0 0
  %64 = vmatprep.subr.bf16.mxu0 0
  %65 = vmatpush1.bf16.msra.mxu0 0
  %66 = vmatprep.subr.bf16.mxu0 0
  %67 = vmatpush1.bf16.msra.mxu0 0
  %68 = vmatprep.subr.bf16.mxu0 0
  %69 = vmatpush1.bf16.msra.mxu0 0
  %70 = vmatprep.subr.bf16.mxu0 0
  %71 = vmatpush1.bf16.msra.mxu0 0
  %72 = vmatprep.subr.bf16.mxu0 0
  %73 = vmatpush1.bf16.msra.mxu0 0
  %74 = vmatprep.subr.bf16.mxu0 0
  %75 = vmatpush1.bf16.msra.mxu0 0
  %76 = vmatprep.subr.bf16.mxu0 0
  %77 = vmatpush1.bf16.msra.mxu0 0
  %78 = vmatprep.subr.bf16.mxu0 0
  %79 = vmatpush1.bf16.msra.mxu0 0
  %80 = vmatprep.mubr.bf16.mxu0 0
  %81 = vmatmul.mubr.bf16.gmra.mrb[0].mxu0 %v42
  %v82 = vpop.f32.mrb[0].mxu0
  %v83 = vadd.f32 %v38, %v82
  %v84 = vpop.f32.mrb[0].mxu0
  %v85 = vpop.f32.mrb[0].mxu0
  %v86 = vpop.f32.mrb[0].mxu0
  %87 = vdwg.mxu0
  %v88 = vand.u32 2147483647, %v83
  %vm89 = vcmp.le.f32.partialorder %v88, 0.7853982
  %vm90 = vcmp.lt.s32.totalorder %v83, 0
  %v91 = vand.u32 %v83, 2139095040
  %v92 = vshrl.u32 %v91, 23
  %v93 = vsub.s32 %v92, 127
  %v94 = vand.u32 2147483647, %v83
  %v95 = vand.u32 %v94, 8388607
  %v96 = vor.u32 %v95, 8388608
  %v97 = vsub.s32 0, %v96
  %v98 = vadd.s32 %v93, 1
  %vm99 = vcmp.gt.s32.totalorder %v98, 0
  %v100 = vsel %vm99, %v98, 0
  %v101 = vshrl.u32 %v100, 5
  %v102 = vand.u32 %v100, 31
  %v103 = vsub.s32 32, %v102
  %v104 = vshrl.u32 683565275, %v103
  %v105 = vshll.u32 683565275, %v102
  %v106 = vshrl.u32 2475754826, %v103
  %v107 = vor.u32 %v105, %v106
  %v108 = vshll.u32 2475754826, %v102
  %v109 = vshrl.u32 2131351028, %v103
  %v110 = vor.u32 %v108, %v109
  %v111 = vshll.u32 2131351028, %v102
  %v112 = vshrl.u32 2102212464, %v103
  %v113 = vor.u32 %v111, %v112
  %v114 = vshll.u32 2102212464, %v102
  %v115 = vshrl.u32 920167782, %v103
  %v116 = vor.u32 %v114, %v115
  %v117 = vshll.u32 920167782, %v102
  %v118 = vshrl.u32 1326507024, %v103
  %v119 = vor.u32 %v117, %v118
  %vm120 = vcmp.lt.s32.totalorder %v101, 1
  %vm121 = vcmp.lt.s32.totalorder %v101, 2
  %vm122 = vcmp.lt.s32.totalorder %v101, 3
  %vm123 = vcmp.lt.s32.totalorder %v101, 4
  %v124 = vsel %vm120, %v104, %v107
  %v125 = vsel %vm123, %v113, 2102212464
  %v126 = vsel %vm122, %v110, %v125
  %v127 = vsel %vm121, %v124, %v126
  %v128 = vsel %vm120, %v107, %v110
  %v129 = vsel %vm123, %v116, 920167782
  %v130 = vsel %vm122, %v113, %v129
  %v131 = vsel %vm121, %v128, %v130
  %v132 = vsel %vm120, %v110, %v113
  %v133 = vsel %vm123, %v119, 1326507024
  %v134 = vsel %vm122, %v116, %v133
  %v135 = vsel %vm121, %v132, %v134
  %v136 = vshll.u32 %v96, 8
  %v137 = vmul.u32.u64.compose %v136, %v135
  %v138 = vextract.low.u32 %v137
  %v139 = vextract.high.u32 %v137
  %v140 = vmul.u32.u64.compose %v136, %v131
  %v141 = vextract.low.u32 %v140
  %v142 = vextract.high.u32 %v140
  %v143 = vmul.u32 %v136, %v127
  %v144 = vadd.s32 %v139, %v141
  %vm145 = vc.u32 %v139, %v141
  %v146 = vadd.s32 %v142, 1
  %v147 = vsel %vm145, %v146, %v142
  %v148 = vadd.s32 %v143, %v147
  %v149 = vadd.s32 %v148, 536870912
  %v150 = vshrl.u32 %v149, 30
  %v151 = vshll.u32 %v150, 30
  %v152 = vsub.s32 %v148, %v151
  %vm153 = vcmp.lt.s32.totalorder %v152, 0
  %v154 = vsub.s32 0, %v152
  %v155 = vsel %vm153, %v154, %v152
  %v156 = vclz %v155
  %v157 = vsub.s32 %v156, 2
  %vm158 = vcmp.gt.s32.totalorder 0, %v157
  %v159 = vsel %vm158, 0, %v157
  %v160 = vsub.s32 32, %v159
  %v161 = vshll.u32 %v152, %v159
  %v162 = vshrl.u32 %v144, %v160
  %v163 = vor.u32 %v161, %v162
  %v164 = vsub.s32 4294967266, %v159
  %v165 = vadd.s32 %v164, 127
  %v166 = vshll.u32 %v165, 23
  %v167 = vor.u32 4788187, %v166
  %v168 = vand.u32 2147483647, %v167
  %v170 = vcvt.s32.f32 %v163
  %v171 = vmul.f32 %v170, %v168
  %v172 = vxor.u32 %v171, 2147483648
  %v173 = vsel %vm90, %v172, %v171
  %v174 = vsub.s32 4, %v150
  %v175 = vsel %vm90, %v174, %v150
  %v176 = vsel %vm89, %v83, %v173
  %v177 = vsel %vm89, 0, %v175
  %v178 = vcosq.f32.pop %v176
  %v179 = vsinq.f32.pop %v176
  %vm180 = vweird.f32 %v83
  %v181 = vand.u32 %v177, 3
  %vm182 = vcmp.lt.s32.totalorder %v181, 2
  %vm183 = vcmp.eq.s32.totalorder %v181, 0
  %v184 = vxor.u32 %v179, 2147483648
  %v185 = vsel %vm183, %v178, %v184
  %vm186 = vcmp.eq.s32.totalorder %v181, 2
  %v187 = vxor.u32 %v178, 2147483648
  %v188 = vsel %vm186, %v187, %v179
  %v189 = vsel %vm182, %v185, %v188
  %v190 = vsel %vm180, nan, %v189
  %v191 = vpack.c.bf16 %v190, %v190
  %v192 = vld [vmem:[%s3] sm:$0xf]
  %v193 = vld [vmem:[%s3 + $0x4] sm:$0xf]
  %v194 = vld [vmem:[%s3 + $0x8] sm:$0xf]
  %v195 = vld [vmem:[%s3 + $0xc] sm:$0xf]
  %v196 = vld [vmem:[%s3 + $0x10] sm:$0xf]
  %v197 = vld [vmem:[%s3 + $0x14] sm:$0xf]
  %v198 = vld [vmem:[%s3 + $0x18] sm:$0xf]
  %v199 = vld [vmem:[%s3 + $0x1c] sm:$0xf]
  %v200 = vld [vmem:[%s3 + $0x20] sm:$0xf]
  %v201 = vld [vmem:[%s3 + $0x24] sm:$0xf]
  %v202 = vld [vmem:[%s3 + $0x28] sm:$0xf]
  %v203 = vld [vmem:[%s3 + $0x2c] sm:$0xf]
  %v204 = vld [vmem:[%s3 + $0x30] sm:$0xf]
  %v205 = vld [vmem:[%s3 + $0x34] sm:$0xf]
  %v206 = vld [vmem:[%s3 + $0x38] sm:$0xf]
  %v207 = vld [vmem:[%s3 + $0x3c] sm:$0xf]
  %v208 = vld [vmem:[%s4] sm:$0xf]
  %v209 = vmul.f32 %v30, %v30
  %v210 = vld [vmem:[%s5] sm:$0xf]
  %v212 = vsel %vm40, %v209, 0
  %vm214 = vcmask 1043456
  %v216 = vsel %vm214, %v210, 0
  %218 = vmatprep.subr.mxu0 0.0
  %219 = vmatpush1.msra.mxu0 %v216
  %220 = vmatprep.subr.mxu0 0.0
  %221 = vmatpush1.msra.mxu0 0.0
  %222 = vmatprep.subr.mxu0 0.0
  %223 = vmatpush1.msra.mxu0 0.0
  %224 = vmatprep.subr.mxu0 0.0
  %225 = vmatpush1.msra.mxu0 0.0
  %226 = vmatprep.subr.mxu0 0.0
  %227 = vmatpush1.msra.mxu0 0.0
  %228 = vmatprep.subr.mxu0 0.0
  %229 = vmatpush1.msra.mxu0 0.0
  %230 = vmatprep.subr.mxu0 0.0
  %231 = vmatpush1.msra.mxu0 0.0
  %232 = vmatprep.subr.mxu0 0.0
  %233 = vmatpush1.msra.mxu0 0.0
  %234 = vmatprep.subr.mxu0 0.0
  %235 = vmatpush1.msra.mxu0 0.0
  %236 = vmatprep.subr.mxu0 0.0
  %237 = vmatpush1.msra.mxu0 0.0
  %238 = vmatprep.subr.mxu0 0.0
  %239 = vmatpush1.msra.mxu0 0.0
  %240 = vmatprep.subr.mxu0 0.0
  %241 = vmatpush1.msra.mxu0 0.0
  %242 = vmatprep.subr.mxu0 0.0
  %243 = vmatpush1.msra.mxu0 0.0
  %244 = vmatprep.subr.mxu0 0.0
  %245 = vmatpush1.msra.mxu0 0.0
  %246 = vmatprep.subr.mxu0 0.0
  %247 = vmatpush1.msra.mxu0 0.0
  %248 = vmatprep.subr.mxu0 0.0
  %249 = vmatpush1.msra.mxu0 0.0
  %250 = vmatprep.subr.mxu0 0.0
  %251 = vmatpush1.msra.mxu0 0.0
  %252 = vmatprep.subr.mxu0 0.0
  %253 = vmatpush1.msra.mxu0 0.0
  %254 = vmatprep.subr.mxu0 0.0
  %255 = vmatpush1.msra.mxu0 0.0
  %256 = vmatprep.subr.mxu0 0.0
  %257 = vmatpush1.msra.mxu0 0.0
  %258 = vmatprep.subr.mxu0 0.0
  %259 = vmatpush1.msra.mxu0 0.0
  %260 = vmatprep.subr.mxu0 0.0
  %261 = vmatpush1.msra.mxu0 0.0
  %262 = vmatprep.subr.mxu0 0.0
  %263 = vmatpush1.msra.mxu0 0.0
  %264 = vmatprep.subr.mxu0 0.0
  %265 = vmatpush1.msra.mxu0 0.0
  %266 = vmatprep.subr.mxu0 0.0
  %267 = vmatpush1.msra.mxu0 0.0
  %268 = vmatprep.subr.mxu0 0.0
  %269 = vmatpush1.msra.mxu0 0.0
  %270 = vmatprep.subr.mxu0 0.0
  %271 = vmatpush1.msra.mxu0 0.0
  %272 = vmatprep.subr.mxu0 0.0
  %273 = vmatpush1.msra.mxu0 0.0
  %274 = vmatprep.subr.mxu0 0.0
  %275 = vmatpush1.msra.mxu0 0.0
  %276 = vmatprep.subr.mxu0 0.0
  %277 = vmatpush1.msra.mxu0 0.0
  %278 = vmatprep.subr.mxu0 0.0
  %279 = vmatpush1.msra.mxu0 0.0
  %280 = vmatprep.subr.mxu0 0.0
  %281 = vmatpush1.msra.mxu0 0.0
  %282 = vmatprep.mubr.f32.mxu0 0.0
  %283 = vmatmul.mubr.f32.gmra.mrb[0].mxu0 %v212
  %v284 = vpop.f32.mrb[0].mxu0
  %v285 = vadd.f32 0.0, %v284
  %v286 = vpop.f32.mrb[0].mxu0
  %287 = vdwg.mxu0
  %v289 = vsel %vm40, %v30, 0
  %v292 = vsel %vm214, %v208, 0
  %294 = vmatprep.subr.mxu0 0.0
  %295 = vmatpush1.msra.mxu0 %v292
  %296 = vmatprep.subr.mxu0 0.0
  %297 = vmatpush1.msra.mxu0 0.0
  %298 = vmatprep.subr.mxu0 0.0
  %299 = vmatpush1.msra.mxu0 0.0
  %300 = vmatprep.subr.mxu0 0.0
  %301 = vmatpush1.msra.mxu0 0.0
  %302 = vmatprep.subr.mxu0 0.0
  %303 = vmatpush1.msra.mxu0 0.0
  %304 = vmatprep.subr.mxu0 0.0
  %305 = vmatpush1.msra.mxu0 0.0
  %306 = vmatprep.subr.mxu0 0.0
  %307 = vmatpush1.msra.mxu0 0.0
  %308 = vmatprep.subr.mxu0 0.0
  %309 = vmatpush1.msra.mxu0 0.0
  %310 = vmatprep.subr.mxu0 0.0
  %311 = vmatpush1.msra.mxu0 0.0
  %312 = vmatprep.subr.mxu0 0.0
  %313 = vmatpush1.msra.mxu0 0.0
  %314 = vmatprep.subr.mxu0 0.0
  %315 = vmatpush1.msra.mxu0 0.0
  %316 = vmatprep.subr.mxu0 0.0
  %317 = vmatpush1.msra.mxu0 0.0
  %318 = vmatprep.subr.mxu0 0.0
  %319 = vmatpush1.msra.mxu0 0.0
  %320 = vmatprep.subr.mxu0 0.0
  %321 = vmatpush1.msra.mxu0 0.0
  %322 = vmatprep.subr.mxu0 0.0
  %323 = vmatpush1.msra.mxu0 0.0
  %324 = vmatprep.subr.mxu0 0.0
  %325 = vmatpush1.msra.mxu0 0.0
  %326 = vmatprep.subr.mxu0 0.0
  %327 = vmatpush1.msra.mxu0 0.0
  %328 = vmatprep.subr.mxu0 0.0
  %329 = vmatpush1.msra.mxu0 0.0
  %330 = vmatprep.subr.mxu0 0.0
  %331 = vmatpush1.msra.mxu0 0.0
  %332 = vmatprep.subr.mxu0 0.0
  %333 = vmatpush1.msra.mxu0 0.0
  %334 = vmatprep.subr.mxu0 0.0
  %335 = vmatpush1.msra.mxu0 0.0
  %336 = vmatprep.subr.mxu0 0.0
  %337 = vmatpush1.msra.mxu0 0.0
  %338 = vmatprep.subr.mxu0 0.0
  %339 = vmatpush1.msra.mxu0 0.0
  %340 = vmatprep.subr.mxu0 0.0
  %341 = vmatpush1.msra.mxu0 0.0
  %342 = vmatprep.subr.mxu0 0.0
  %343 = vmatpush1.msra.mxu0 0.0
  %344 = vmatprep.subr.mxu0 0.0
  %345 = vmatpush1.msra.mxu0 0.0
  %346 = vmatprep.subr.mxu0 0.0
  %347 = vmatpush1.msra.mxu0 0.0
  %348 = vmatprep.subr.mxu0 0.0
  %349 = vmatpush1.msra.mxu0 0.0
  %350 = vmatprep.subr.mxu0 0.0
  %351 = vmatpush1.msra.mxu0 0.0
  %352 = vmatprep.subr.mxu0 0.0
  %353 = vmatpush1.msra.mxu0 0.0
  %354 = vmatprep.subr.mxu0 0.0
  %355 = vmatpush1.msra.mxu0 0.0
  %356 = vmatprep.subr.mxu0 0.0
  %357 = vmatpush1.msra.mxu0 0.0
  %358 = vmatprep.mubr.f32.mxu0 0.0
  %359 = vmatmul.mubr.f32.gmra.mrb[0].mxu0 %v289
  %v360 = vpop.f32.mrb[0].mxu0
  %v361 = vadd.f32 %v285, %v360
  %v362 = vpop.f32.mrb[0].mxu0
  %363 = vdwg.mxu0
  %v364 = vld [vmem:[%s6] sm:$0x1]
  %v366 = vlaneseq
  %v367 = vshrl.u32 %v366, 7
  %v368 = vsub.s32 0, %v367
  %v369 = vrot.slane %v364, %v368
  %v371 = vadd.f32 %v361, %v369
  %v372 = vmul.f32 %v371, 1.442695
  %v373 = vpow.pop %v372
  %v374 = vpack.c.bf16 %v373, %v373
  %v375 = vld [vmem:[%s7] sm:$0xf]
  %v376 = vld [vmem:[%s7 + $0x4] sm:$0xf]
  %v377 = vld [vmem:[%s7 + $0x8] sm:$0xf]
  %v378 = vld [vmem:[%s7 + $0xc] sm:$0xf]
  %v379 = vld [vmem:[%s7 + $0x10] sm:$0xf]
  %v380 = vld [vmem:[%s7 + $0x14] sm:$0xf]
  %v381 = vld [vmem:[%s7 + $0x18] sm:$0xf]
  %v382 = vld [vmem:[%s7 + $0x1c] sm:$0xf]
  %v383 = vld [vmem:[%s7 + $0x20] sm:$0xf]
  %v384 = vld [vmem:[%s7 + $0x24] sm:$0xf]
  %v385 = vld [vmem:[%s7 + $0x28] sm:$0xf]
  %v386 = vld [vmem:[%s7 + $0x2c] sm:$0xf]
  %v387 = vld [vmem:[%s7 + $0x30] sm:$0xf]
  %v388 = vld [vmem:[%s7 + $0x34] sm:$0xf]
  %v389 = vld [vmem:[%s7 + $0x38] sm:$0xf]
  %v390 = vld [vmem:[%s7 + $0x3c] sm:$0xf]
  %v407 = vunpack.c.l.b16 %v375
  %v408 = vunpack.c.l.b16 %v376
  %v409 = vunpack.c.l.b16 %v377
  %v410 = vunpack.c.l.b16 %v378
  %v411 = vunpack.c.l.b16 %v379
  %v412 = vunpack.c.l.b16 %v380
  %v413 = vunpack.c.l.b16 %v381
  %v414 = vunpack.c.l.b16 %v382
  %v415 = vunpack.c.l.b16 %v383
  %v416 = vunpack.c.l.b16 %v384
  %v417 = vunpack.c.l.b16 %v385
  %v418 = vunpack.c.l.b16 %v386
  %v419 = vunpack.c.l.b16 %v387
  %v420 = vunpack.c.l.b16 %v388
  %v421 = vunpack.c.l.b16 %v389
  %v422 = vunpack.c.l.b16 %v390
  %v423 = vpack.c.b16 %v408, %v407
  %v424 = vpack.c.b16 %v410, %v409
  %v425 = vpack.c.b16 %v412, %v411
  %v426 = vpack.c.b16 %v414, %v413
  %v427 = vpack.c.b16 %v416, %v415
  %v428 = vpack.c.b16 %v418, %v417
  %v429 = vpack.c.b16 %v420, %v419
  %v430 = vpack.c.b16 %v422, %v421
  %439 = vmatprep.subr.bf16.mxu0 0
  %440 = vmatpush1.bf16.msra.mxu0 %v423
  %441 = vmatprep.subr.bf16.mxu0 0
  %442 = vmatpush1.bf16.msra.mxu0 %v424
  %443 = vmatprep.subr.bf16.mxu0 0
  %444 = vmatpush1.bf16.msra.mxu0 %v425
  %445 = vmatprep.subr.bf16.mxu0 0
  %446 = vmatpush1.bf16.msra.mxu0 %v426
  %447 = vmatprep.subr.bf16.mxu0 0
  %448 = vmatpush1.bf16.msra.mxu0 %v427
  %449 = vmatprep.subr.bf16.mxu0 0
  %450 = vmatpush1.bf16.msra.mxu0 %v428
  %451 = vmatprep.subr.bf16.mxu0 0
  %452 = vmatpush1.bf16.msra.mxu0 %v429
  %453 = vmatprep.subr.bf16.mxu0 0
  %454 = vmatpush1.bf16.msra.mxu0 %v430
  %455 = vmatprep.subr.bf16.mxu0 0
  %456 = vmatpush1.bf16.msra.mxu0 0
  %457 = vmatprep.subr.bf16.mxu0 0
  %458 = vmatpush1.bf16.msra.mxu0 0
  %459 = vmatprep.subr.bf16.mxu0 0
  %460 = vmatpush1.bf16.msra.mxu0 0
  %461 = vmatprep.subr.bf16.mxu0 0
  %462 = vmatpush1.bf16.msra.mxu0 0
  %463 = vmatprep.subr.bf16.mxu0 0
  %464 = vmatpush1.bf16.msra.mxu0 0
  %465 = vmatprep.subr.bf16.mxu0 0
  %466 = vmatpush1.bf16.msra.mxu0 0
  %467 = vmatprep.subr.bf16.mxu0 0
  %468 = vmatpush1.bf16.msra.mxu0 0
  %469 = vmatprep.subr.bf16.mxu0 0
  %470 = vmatpush1.bf16.msra.mxu0 0
  %471 = vmatprep.mubr.bf16.mxu0 0
  %472 = vmatmul.mubr.bf16.gmra.mrb[0].mxu0 %v374
  %v473 = vpop.f32.mrb[0].mxu0
  %v474 = vadd.f32 0.0, %v473
  %v475 = vpop.f32.mrb[0].mxu0
  %v476 = vpop.f32.mrb[0].mxu0
  %v477 = vpop.f32.mrb[0].mxu0
  %478 = vdwg.mxu0
  %v495 = vunpack.c.l.b16 %v192
  %v496 = vunpack.c.l.b16 %v193
  %v497 = vunpack.c.l.b16 %v194
  %v498 = vunpack.c.l.b16 %v195
  %v499 = vunpack.c.l.b16 %v196
  %v500 = vunpack.c.l.b16 %v197
  %v501 = vunpack.c.l.b16 %v198
  %v502 = vunpack.c.l.b16 %v199
  %v503 = vunpack.c.l.b16 %v200
  %v504 = vunpack.c.l.b16 %v201
  %v505 = vunpack.c.l.b16 %v202
  %v506 = vunpack.c.l.b16 %v203
  %v507 = vunpack.c.l.b16 %v204
  %v508 = vunpack.c.l.b16 %v205
  %v509 = vunpack.c.l.b16 %v206
  %v510 = vunpack.c.l.b16 %v207
  %v511 = vpack.c.b16 %v496, %v495
  %v512 = vpack.c.b16 %v498, %v497
  %v513 = vpack.c.b16 %v500, %v499
  %v514 = vpack.c.b16 %v502, %v501
  %v515 = vpack.c.b16 %v504, %v503
  %v516 = vpack.c.b16 %v506, %v505
  %v517 = vpack.c.b16 %v508, %v507
  %v518 = vpack.c.b16 %v510, %v509
  %527 = vmatprep.subr.bf16.mxu0 0
  %528 = vmatpush1.bf16.msra.mxu0 %v511
  %529 = vmatprep.subr.bf16.mxu0 0
  %530 = vmatpush1.bf16.msra.mxu0 %v512
  %531 = vmatprep.subr.bf16.mxu0 0
  %532 = vmatpush1.bf16.msra.mxu0 %v513
  %533 = vmatprep.subr.bf16.mxu0 0
  %534 = vmatpush1.bf16.msra.mxu0 %v514
  %535 = vmatprep.subr.bf16.mxu0 0
  %536 = vmatpush1.bf16.msra.mxu0 %v515
  %537 = vmatprep.subr.bf16.mxu0 0
  %538 = vmatpush1.bf16.msra.mxu0 %v516
  %539 = vmatprep.subr.bf16.mxu0 0
  %540 = vmatpush1.bf16.msra.mxu0 %v517
  %541 = vmatprep.subr.bf16.mxu0 0
  %542 = vmatpush1.bf16.msra.mxu0 %v518
  %543 = vmatprep.subr.bf16.mxu0 0
  %544 = vmatpush1.bf16.msra.mxu0 0
  %545 = vmatprep.subr.bf16.mxu0 0
  %546 = vmatpush1.bf16.msra.mxu0 0
  %547 = vmatprep.subr.bf16.mxu0 0
  %548 = vmatpush1.bf16.msra.mxu0 0
  %549 = vmatprep.subr.bf16.mxu0 0
  %550 = vmatpush1.bf16.msra.mxu0 0
  %551 = vmatprep.subr.bf16.mxu0 0
  %552 = vmatpush1.bf16.msra.mxu0 0
  %553 = vmatprep.subr.bf16.mxu0 0
  %554 = vmatpush1.bf16.msra.mxu0 0
  %555 = vmatprep.subr.bf16.mxu0 0
  %556 = vmatpush1.bf16.msra.mxu0 0
  %557 = vmatprep.subr.bf16.mxu0 0
  %558 = vmatpush1.bf16.msra.mxu0 0
  %559 = vmatprep.mubr.bf16.mxu0 0
  %560 = vmatmul.mubr.bf16.gmra.mrb[0].mxu0 %v191
  %v561 = vpop.f32.mrb[0].mxu0
  %v562 = vadd.f32 %v474, %v561
  %v563 = vpop.f32.mrb[0].mxu0
  %v564 = vpop.f32.mrb[0].mxu0
  %v565 = vpop.f32.mrb[0].mxu0
  %566 = vdwg.mxu0
  %567 = vst.msk [vmem:[%s8] sm:$0xff] %vm40, %v562
  // Predicated region
  $region34: #{tpu_custom_call.1} parent=0 // pred_check
    _
  $region35: #{tpu_custom_call.1} parent=0 // pred_check_branch
    %569 = sbr.rel (0) target = $region37
  $region36: #{tpu_custom_call.1} parent=0 // pred_region
    _
  $region37: #{tpu_custom_call.1} parent=0 // pred_fallthru
    _
  // Predicated region
  $region38: #{tpu_custom_call.1} parent=0 // pred_check
    _
  $region39: #{tpu_custom_call.1} parent=0 // pred_check_branch
    %571 = sbr.rel (0) target = $region41
  $region40: #{tpu_custom_call.1} parent=0 // pred_region
    _
  $region41: #{tpu_custom_call.1} parent=0 // pred_fallthru
    _

</llo_original>
